<compile_context>
chip_gen: v6e
topology: v6e:2x2x1
jax: 0.10.0
libtpu: 0.0.40
codegen_flags: <defaults>
</compile_context>

<pallas_src>
import functools

import jax
import jax.numpy as jnp
from jax.experimental import pallas as pl
from jax.experimental.pallas import tpu as pltpu

_LANE = 128


def _fold_to_vreg(v, tr):
    """(tr, 128) -> (8, 128) partial sum using 8-aligned static sublane slices.

    Pairwise tree keeps the add chain log-depth; every slice is a plain vreg
    selection (no relayout, no cross-lane work).  The final cross-lane /
    cross-sublane reduction of the tiny partial slabs happens in the wrapper.
    """
    parts = [v[8 * b:8 * (b + 1), :] for b in range(tr // 8)]
    while len(parts) > 1:
        nxt = [parts[k] + parts[k + 1] for k in range(0, len(parts) - 1, 2)]
        if len(parts) % 2:
            nxt.append(parts[-1])
        parts = nxt
    return parts[0]


def _bin_rot_kernel(out_ref, tgt_ref, partial_ref, *, tr, valid_in_last):
    i = pl.program_id(0)

    # Channel-major, lane-dense tile: each channel is a (tr, 128) sublane view.
    l0 = out_ref[0]               # bin logit 0
    l1 = out_ref[1]               # bin logit 1
    r0 = out_ref[2]               # residual for class 0
    r1 = out_ref[3]               # residual for class 1
    t = tgt_ref[...]              # (tr, 128) residual angles

    is_pos = t > 0.0              # target_class == 1

    # 2-way cross-entropy == softplus of the margin (numerically stable form):
    #   ce = logsumexp(l0, l1) - logit_target = log(1 + exp(l_other - l_target))
    x = jnp.where(is_pos, l0 - l1, l1 - l0)
    ce = jnp.maximum(x, 0.0) + jnp.log(1.0 + jnp.exp(-jnp.abs(x)))

    # Residual gathered by class + smooth L1 (beta = 1.0).
    res = jnp.where(is_pos, r1, r0)
    diff = res - t
    ad = jnp.abs(diff)
    sl1 = jnp.where(ad < 1.0, 0.5 * diff * diff, ad - 0.5)

    loss_elem = ce + sl1          # both losses share the same mean over N

    last = pl.num_programs(0) - 1

    # Interior tiles: every sample is valid -> no mask work.
    @pl.when(i < last)
    def _():
        partial_ref[...] = _fold_to_vreg(loss_elem, tr)

    # Boundary tile: mask zero-padded samples (they'd contribute ln 2) and any
    # out-of-bounds edge-block rows (undefined data).  Select -> NaN-safe.
    @pl.when(i == last)
    def _():
        row = jax.lax.broadcasted_iota(jnp.int32, (tr, _LANE), 0)
        lane = jax.lax.broadcasted_iota(jnp.int32, (tr, _LANE), 1)
        valid = row * _LANE + lane < valid_in_last   # static, small -> no i32 overflow
        partial_ref[...] = _fold_to_vreg(jnp.where(valid, loss_elem, 0.0), tr)


def bin_rot_loss_channel_major(output_cm, target, *, tile_sublanes=1024):
    """Loss from channel-major output (4, N) = [logit0, logit1, res0, res1]."""
    out_cm = jnp.asarray(output_cm, jnp.float32)
    tgt = jnp.asarray(target, jnp.float32).reshape(-1)
    n = tgt.shape[0]
    assert out_cm.shape == (4, n)

    # Rows-of-128 geometry.  Pad the sample axis only when N is not already a
    # multiple of 128 (the aligned case is a pure metadata reshape).
    r = int(pl.cdiv(n, _LANE))
    n128 = r * _LANE
    if n128 != n:
        out_cm = jnp.pad(out_cm, ((0, 0), (0, n128 - n)))
        tgt = jnp.pad(tgt, (0, n128 - n))
    out_cm = out_cm.reshape(4, r, _LANE)
    tgt = tgt.reshape(r, _LANE)

    # Tile size: multiple of 8 sublane rows, as large as useful.
    tile_sublanes = max(8, (int(tile_sublanes) // 8) * 8)
    tr = min(tile_sublanes, ((r + 7) // 8) * 8)
    num_tiles = int(pl.cdiv(r, tr))
    # Real samples inside the last tile (rest is zero-pad or OOB edge rows).
    valid_in_last = n - (num_tiles - 1) * tr * _LANE

    partials = pl.pallas_call(
        functools.partial(_bin_rot_kernel, tr=tr, valid_in_last=valid_in_last),
        out_shape=jax.ShapeDtypeStruct((num_tiles * 8, _LANE), jnp.float32),
        grid_spec=pltpu.PrefetchScalarGridSpec(
            num_scalar_prefetch=0,
            grid=(num_tiles,),
            in_specs=[
                pl.BlockSpec((4, tr, _LANE), lambda i: (0, i, 0)),
                pl.BlockSpec((tr, _LANE), lambda i: (i, 0)),
            ],
            out_specs=pl.BlockSpec((8, _LANE), lambda i: (i, 0)),
        ),
        compiler_params=pltpu.CompilerParams(
            dimension_semantics=("parallel",)),
    )(out_cm, tgt)

    # Single tiny final reduction over the per-tile (8, 128) partial slabs.
    return jnp.sum(partials) / jnp.float32(n)


def bin_rot_loss(output, target, *, tile_sublanes=1024):
    """Matches BinRotLoss.forward(output, target) with output.view(-1, 4)."""
    out2 = jnp.asarray(output, jnp.float32).reshape(-1, 4)   # (N, 4)
    tgt = jnp.asarray(target, jnp.float32).reshape(-1)       # (N,)
    # TODO(synk): emit channel-major (4, N) from the upstream head so this
    # transpose pass (the only extra HBM traffic left) disappears.
    out_cm = jnp.transpose(out2, (1, 0))                     # one fused pass
    return bin_rot_loss_channel_major(out_cm, tgt, tile_sublanes=tile_sublanes)


def bin_rot_loss_ref(output, target):
    """Plain-JAX reference mirroring the PyTorch module."""
    output = jnp.asarray(output, jnp.float32).reshape(-1, 4)
    target = jnp.asarray(target, jnp.float32).reshape(-1)
    cls = (target > 0).astype(jnp.int32)                     # target_class
    logits = output[:, :2]
    lse = jax.scipy.special.logsumexp(logits, axis=1)
    logit_t = jnp.take_along_axis(logits, cls[:, None], axis=1)[:, 0]
    loss_bin = jnp.mean(lse - logit_t)
    res = jnp.take_along_axis(output[:, 2:], cls[:, None], axis=1)[:, 0]
    diff = res - target
    ad = jnp.abs(diff)
    loss_res = jnp.mean(jnp.where(ad < 1.0, 0.5 * diff * diff, ad - 0.5))
    return loss_bin + loss_res


if __name__ == "__main__":
    key = jax.random.PRNGKey(0)
    k1, k2, k3, k4 = jax.random.split(key, 4)

    # Small shapes consistent with the module: batch=2, 64 objects, 4 values.
    B, K = 2, 64
    output = jax.random.normal(k1, (B, K, 4), dtype=jnp.float32)
    target = jax.random.normal(k2, (B, K), dtype=jnp.float32)   # residual angles

    loss = jax.block_until_ready(bin_rot_loss(output, target))
    ref = bin_rot_loss_ref(output, target)
    assert jnp.allclose(loss, ref, rtol=1e-5, atol=1e-5), (loss, ref)

    # Ragged multi-tile case: exercises the 128-remainder pad, the cdiv grid
    # with a partial edge block, and both interior / boundary mask branches.
    B2, K2 = 2, 600                                             # N = 1200
    output2 = jax.random.normal(k3, (B2, K2, 4), dtype=jnp.float32)
    target2 = jax.random.normal(k4, (B2, K2), dtype=jnp.float32)
    loss2 = jax.block_until_ready(bin_rot_loss(output2, target2, tile_sublanes=8))
    ref2 = bin_rot_loss_ref(output2, target2)
    assert jnp.allclose(loss2, ref2, rtol=1e-5, atol=1e-5), (loss2, ref2)

    print("KERNEL_OK")
</pallas_src>

<mosaic_0001>
module attributes {stable_mosaic.version = 11 : i64} {
  func.func @_bin_rot_kernel(%arg0: i32, %arg1: memref<4x8x128xf32, #tpu.memory_space<vmem>>, %arg2: memref<8x128xf32, #tpu.memory_space<vmem>>, %arg3: memref<8x128xf32, #tpu.memory_space<vmem>>) attributes {dimension_semantics = [#tpu.dimension_semantics<parallel>], iteration_bounds = array<i64: 1>, scalar_prefetch = 0 : i64, scratch_operands = 0 : i64, tpu.core_type = #tpu.core_type<tc>, window_params = [{transform_indices = @transform_0, window_bounds = array<i64: 4, 8, 128>}, {transform_indices = @transform_1, window_bounds = array<i64: 8, 128>}, {transform_indices = @transform_2, window_bounds = array<i64: 8, 128>}]} {
    %c0 = arith.constant 0 : index
    %c0_0 = arith.constant 0 : index
    %c0_1 = arith.constant 0 : index
    %0 = vector.load %arg1[%c0, %c0_0, %c0_1] : memref<4x8x128xf32, #tpu.memory_space<vmem>>, vector<1x8x128xf32>
    %1 = vector.shape_cast %0 : vector<1x8x128xf32> to vector<8x128xf32>
    %c1 = arith.constant 1 : index
    %c0_2 = arith.constant 0 : index
    %c0_3 = arith.constant 0 : index
    %2 = vector.load %arg1[%c1, %c0_2, %c0_3] : memref<4x8x128xf32, #tpu.memory_space<vmem>>, vector<1x8x128xf32>
    %3 = vector.shape_cast %2 : vector<1x8x128xf32> to vector<8x128xf32>
    %c2 = arith.constant 2 : index
    %c0_4 = arith.constant 0 : index
    %c0_5 = arith.constant 0 : index
    %4 = vector.load %arg1[%c2, %c0_4, %c0_5] : memref<4x8x128xf32, #tpu.memory_space<vmem>>, vector<1x8x128xf32>
    %5 = vector.shape_cast %4 : vector<1x8x128xf32> to vector<8x128xf32>
    %c3 = arith.constant 3 : index
    %c0_6 = arith.constant 0 : index
    %c0_7 = arith.constant 0 : index
    %6 = vector.load %arg1[%c3, %c0_6, %c0_7] : memref<4x8x128xf32, #tpu.memory_space<vmem>>, vector<1x8x128xf32>
    %7 = vector.shape_cast %6 : vector<1x8x128xf32> to vector<8x128xf32>
    %c0_8 = arith.constant 0 : index
    %c0_9 = arith.constant 0 : index
    %8 = vector.load %arg2[%c0_8, %c0_9] : memref<8x128xf32, #tpu.memory_space<vmem>>, vector<8x128xf32>
    %cst = arith.constant 0.000000e+00 : f32
    %9 = vector.broadcast %cst : f32 to vector<8x128xf32>
    %10 = arith.cmpf ogt, %8, %9 : vector<8x128xf32>
    %11 = arith.subf %1, %3 : vector<8x128xf32>
    %12 = arith.subf %3, %1 : vector<8x128xf32>
    %13 = arith.select %10, %11, %12 : vector<8x128xi1>, vector<8x128xf32>
    %cst_10 = arith.constant 0.000000e+00 : f32
    %14 = vector.broadcast %cst_10 : f32 to vector<8x128xf32>
    %15 = arith.maximumf %13, %14 : vector<8x128xf32>
    %16 = math.absf %13 : vector<8x128xf32>
    %cst_11 = arith.constant 0.000000e+00 : f32
    %17 = vector.broadcast %cst_11 : f32 to vector<8x128xf32>
    %18 = arith.subf %17, %16 : vector<8x128xf32>
    %19 = math.exp %18 : vector<8x128xf32>
    %cst_12 = arith.constant 1.000000e+00 : f32
    %20 = vector.broadcast %cst_12 : f32 to vector<8x128xf32>
    %21 = arith.addf %20, %19 : vector<8x128xf32>
    %22 = math.log %21 : vector<8x128xf32>
    %23 = arith.addf %15, %22 : vector<8x128xf32>
    %24 = arith.select %10, %7, %5 : vector<8x128xi1>, vector<8x128xf32>
    %25 = arith.subf %24, %8 : vector<8x128xf32>
    %26 = math.absf %25 : vector<8x128xf32>
    %cst_13 = arith.constant 1.000000e+00 : f32
    %27 = vector.broadcast %cst_13 : f32 to vector<8x128xf32>
    %28 = arith.cmpf olt, %26, %27 : vector<8x128xf32>
    %cst_14 = arith.constant 5.000000e-01 : f32
    %29 = vector.broadcast %cst_14 : f32 to vector<8x128xf32>
    %30 = arith.mulf %29, %25 : vector<8x128xf32>
    %31 = arith.mulf %30, %25 : vector<8x128xf32>
    %cst_15 = arith.constant 5.000000e-01 : f32
    %32 = vector.broadcast %cst_15 : f32 to vector<8x128xf32>
    %33 = arith.subf %26, %32 : vector<8x128xf32>
    %34 = arith.select %28, %31, %33 : vector<8x128xi1>, vector<8x128xf32>
    %35 = arith.addf %23, %34 : vector<8x128xf32>
    %c0_i32 = arith.constant 0 : i32
    %36 = arith.cmpi slt, %arg0, %c0_i32 : i32
    %37 = arith.extui %36 : i1 to i32
    %c0_i32_16 = arith.constant 0 : i32
    %38 = arith.cmpi ne, %37, %c0_i32_16 : i32
    scf.if %38 {
      %c0_19 = arith.constant 0 : index
      %c0_20 = arith.constant 0 : index
      %42 = vector.load %arg3[%c0_19, %c0_20] : memref<8x128xf32, #tpu.memory_space<vmem>>, vector<8x128xf32>
      tpu.vector_store %arg3[%c0_19, %c0_20], %35 {strides = array<i32>} : memref<8x128xf32, #tpu.memory_space<vmem>>, vector<8x128xf32>,
    } else {
    }
    %c0_i32_17 = arith.constant 0 : i32
    %39 = arith.cmpi eq, %arg0, %c0_i32_17 : i32
    %40 = arith.extui %39 : i1 to i32
    %c0_i32_18 = arith.constant 0 : i32
    %41 = arith.cmpi ne, %40, %c0_i32_18 : i32
    scf.if %41 {
      %42 = tpu.iota {dimensions = array<i32: 0>} : vector<8x128xi32>
      %43 = tpu.iota {dimensions = array<i32: 1>} : vector<8x128xi32>
      %c128_i32 = arith.constant 128 : i32
      %44 = vector.broadcast %c128_i32 : i32 to vector<8x128xi32>
      %45 = arith.muli %42, %44 : vector<8x128xi32>
      %46 = arith.addi %45, %43 : vector<8x128xi32>
      %c128_i32_19 = arith.constant 128 : i32
      %47 = vector.broadcast %c128_i32_19 : i32 to vector<8x128xi32>
      %48 = arith.cmpi slt, %46, %47 : vector<8x128xi32>
      %cst_20 = arith.constant 0.000000e+00 : f32
      %49 = vector.broadcast %cst_20 : f32 to vector<8x128xf32>
      %50 = arith.select %48, %35, %49 : vector<8x128xi1>, vector<8x128xf32>
      %c0_21 = arith.constant 0 : index
      %c0_22 = arith.constant 0 : index
      %51 = vector.load %arg3[%c0_21, %c0_22] : memref<8x128xf32, #tpu.memory_space<vmem>>, vector<8x128xf32>
      tpu.vector_store %arg3[%c0_21, %c0_22], %50 {strides = array<i32>} : memref<8x128xf32, #tpu.memory_space<vmem>>, vector<8x128xf32>,
    } else {
    }
    return
  }
  func.func @transform_0(%arg0: i32) -> (i32, i32, i32) {
    %c0_i32 = arith.constant 0 : i32
    %c0_i32_0 = arith.constant 0 : i32
    %c0_i32_1 = arith.constant 0 : i32
    return %c0_i32, %arg0, %c0_i32_0 : i32, i32, i32
  }
  func.func @transform_1(%arg0: i32) -> (i32, i32) {
    %c0_i32 = arith.constant 0 : i32
    %c0_i32_0 = arith.constant 0 : i32
    return %arg0, %c0_i32 : i32, i32
  }
  func.func @transform_2(%arg0: i32) -> (i32, i32) {
    %c0_i32 = arith.constant 0 : i32
    %c0_i32_0 = arith.constant 0 : i32
    return %arg0, %c0_i32 : i32, i32
  }
}

</mosaic_0001>

<llo_original>
// kernel: tpu_custom_call.1
$region0: #{tpu_custom_call.1}
  #allocation0 [shape = 'u32[]', space=smem, size = 0x4, offset = 0x4, fixed_abs, tag = 'smem constant byte address 0x4 - core index']
  #allocation1 [shape = 'u32[144,128]{1,0:T(1,128)}', space=vmem, size = 0x12000, scoped, tag = 'internal scratch']
  #allocation6 [shape = 's32[]', space=sflag, size = 0x4, offset = 0, fixed_abs, tag = 'sflag constant byte address 0x0 - dummy sync flag']
  %s0 = inlined_call_operand.hbm [shape: f32[4,1,128], index: 0, kind: input, shape index: {}]
  %s1 = inlined_call_operand.vmem [shape: f32[1,128], index: 1, kind: input, shape index: {}]
  %s2 = inlined_call_operand.hbm [shape: f32[8,128], index: 2, kind: output, shape index: {}]
  %s3 = sld [smem:[#allocation0]]
  $region30: #{tpu_custom_call.1} parent=0
    _
  %s5 = ssub.s32 1, %s3
  %s6 = scalar_select 0, %s5, %s3
  $region1: #{tpu_custom_call.1} parent=0
    #allocation2 [shape = 'u8[16384]{0}', space=vmem, size = 0x4000, scoped, tag = 'input window, operand 0, single buffered']
    #allocation3 [shape = 's32[1]{0}', space=sflag, size = 0x4, scoped, tag = 'scoped memory for tpu_custom_call.1']
    #allocation4 [shape = 's32[1]{0}', space=sflag, size = 0x4, scoped, tag = 'scoped memory for tpu_custom_call.1']
    #allocation5 [shape = 'u8[4096]{0}', space=vmem, size = 0x1000, scoped, tag = 'output window, operand 0, single buffered']
    %7 = vsyncpa [#allocation3], 0
    %8 = vsyncpa [#allocation4], 0
    // Predicated region
    $region2: #{tpu_custom_call.1} parent=1 // pred_check
      _
    $region3: #{tpu_custom_call.1} parent=1 // pred_check_branch
      %10 = sbr.rel (0) target = $region5
    $region4: #{tpu_custom_call.1} parent=1 // pred_region
      #allocation7 [shape = 'u32[6]{0}', space=smem, size = 0x18, scoped, tag = 'DMA stride descriptor']
      %s12 = ssub.s32 512, 64
      %13 = vsyncadd [#allocation3], %s12
      %s15 = sshll.u32 1, 14
      %s16 = sxor.u32 4294967295, %s15
      %s18 = sld [smem:[#allocation0]]
      %s19 = sadd.s32 2, %s18
      %s21 = sshll.u32 7, 26
      %s22 = sxor.u32 4294967295, %s21
      %s23 = sand.u32 0, %s22
      %s24 = sshll.u32 %s19, 26
      %s25 = sor.u32 %s23, %s24
      %s26 = sshll.u32 [#allocation2], 4
      %s27 = int_to_ptr.vmem [resolvable:$true] %s26
      %33 = sst [smem:[#allocation7]] 16
      %s34 = scalar_lea.smem [#allocation7], 1
      %35 = sst [smem:[%s34]] 128
      %s36 = scalar_lea.smem [#allocation7], 2
      %37 = sst [smem:[%s36]] 1
      %s38 = scalar_lea.smem [#allocation7], 3
      %39 = sst [smem:[%s38]] 16
      %s40 = scalar_lea.smem [#allocation7], 4
      %41 = sst [smem:[%s40]] 16
      %s42 = scalar_lea.smem [#allocation7], 5
      %43 = sst [smem:[%s42]] 1
      %45 = dma.general %s0, 64, %s27, [#allocation3], 131072, [#allocation7], %s25, 0
    $region5: #{tpu_custom_call.1} parent=1 // pred_fallthru
      _
    // Predicated region
    $region6: #{tpu_custom_call.1} parent=1 // pred_check
      _
    $region7: #{tpu_custom_call.1} parent=1 // pred_check_branch
      %47 = sbr.rel (0) target = $region9
    $region8: #{tpu_custom_call.1} parent=1 // pred_region
      _
    $region9: #{tpu_custom_call.1} parent=1 // pred_fallthru
      _
    // Predicated region
    $region10: #{tpu_custom_call.1} parent=1 // pred_check
      _
    $region11: #{tpu_custom_call.1} parent=1 // pred_check_branch
      %49 = sbr.rel (0) target = $region13
    $region12: #{tpu_custom_call.1} parent=1 // pred_region
      %50 = dma.done [#allocation3], 512
    $region13: #{tpu_custom_call.1} parent=1 // pred_fallthru
      _
    %v51 = vld [vmem:[#allocation2] sm:$0xff]
    %s52 = scalar_lea.vmem [#allocation2], 8
    %v53 = vld [vmem:[%s52] sm:$0xff]
    %s54 = scalar_lea.vmem [#allocation2], 16
    %v55 = vld [vmem:[%s54] sm:$0xff]
    %s56 = scalar_lea.vmem [#allocation2], 24
    %v57 = vld [vmem:[%s56] sm:$0xff]
    %v58 = vld [vmem:[%s1] sm:$0xff]
    %vm59 = vcmp.gt.f32.partialorder %v58, 0.0
    %v60 = vsub.f32 %v51, %v53
    %v61 = vsub.f32 %v53, %v51
    %v62 = vsel %vm59, %v60, %v61
    %v63 = vmax.f32 %v62, 0.0
    %v64 = vand.u32 2147483647, %v62
    %v65 = vsub.f32 0.0, %v64
    %v66 = vmul.f32 %v65, 1.442695
    %v67 = vpow.pop %v66
    %v68 = vadd.f32 %v67, 1.0
    %v69 = vlog2.pop %v68
    %v70 = vmul.f32 %v69, 0.6931472
    %v71 = vadd.f32 %v63, %v70
    %v72 = vsel %vm59, %v57, %v55
    %v73 = vsub.f32 %v72, %v58
    %v74 = vand.u32 2147483647, %v73
    %vm75 = vcmp.lt.f32.partialorder %v74, 1.0
    %v76 = vmul.f32 %v73, 0.5
    %v77 = vmul.f32 %v76, %v73
    %v78 = vsub.f32 %v74, 0.5
    %v79 = vsel %vm75, %v77, %v78
    %v80 = vadd.f32 %v71, %v79
    %p81 = scmp.lt.s32.totalorder 0, 0
    // Predicated region
    $region14: #{tpu_custom_call.1} parent=1 // pred_check
      %p82 = pneg %p81
    $region15: #{tpu_custom_call.1} parent=1 // pred_check_branch
      %84 = sbr.rel (%p82) target = $region17
    $region16: #{tpu_custom_call.1} parent=1 // pred_region
      %85 = vst [vmem:[#allocation5] sm:$0xff] %v80
    $region17: #{tpu_custom_call.1} parent=1 // pred_fallthru
      _
    %p86 = scmp.eq.s32.totalorder 0, 0
    // Predicated region
    $region18: #{tpu_custom_call.1} parent=1 // pred_check
      %p87 = pneg %p86
    $region19: #{tpu_custom_call.1} parent=1 // pred_check_branch
      %89 = sbr.rel (%p87) target = $region21
    $region20: #{tpu_custom_call.1} parent=1 // pred_region
      %v90 = vlaneseq
      %v91 = vshrl.u32 %v90, 7
      %v92 = vlaneseq
      %v93 = vand.u32 %v92, 127
      %v94 = vmul.u32 %v91, 128
      %v95 = vadd.s32 %v94, %v93
      %vm96 = vcmp.lt.s32.totalorder %v95, 128
      %v97 = vsel %vm96, %v80, 0.0
      %98 = vst [vmem:[#allocation5] sm:$0xff] %v97
    $region21: #{tpu_custom_call.1} parent=1 // pred_fallthru
      _
    // Predicated region
    $region22: #{tpu_custom_call.1} parent=1 // pred_check
      _
    $region23: #{tpu_custom_call.1} parent=1 // pred_check_branch
      %100 = sbr.rel (0) target = $region25
    $region24: #{tpu_custom_call.1} parent=1 // pred_region
      %s102 = ssub.s32 128, 128
      %103 = vsyncadd [#allocation4], %s102
      %s105 = sshll.u32 [#allocation5], 4
      %s106 = int_to_ptr.vmem [resolvable:$true] %s105
      %108 = dma.vmem_to_hbm [thread:$0]  %s106, 128, %s2, [#allocation4]
    $region25: #{tpu_custom_call.1} parent=1 // pred_fallthru
      _
    // Predicated region
    $region26: #{tpu_custom_call.1} parent=1 // pred_check
      _
    $region27: #{tpu_custom_call.1} parent=1 // pred_check_branch
      %110 = sbr.rel (0) target = $region29
    $region28: #{tpu_custom_call.1} parent=1 // pred_region
      %111 = dma.done [#allocation4], 128
    $region29: #{tpu_custom_call.1} parent=1 // pred_fallthru
      _
    %112 = vsyncpa [#allocation3], 1
    %113 = vsyncpa [#allocation4], 1

</llo_original>
